<compile_context>
chip_gen: v5e
topology: v5e:2x2
jax: 0.10.0
libtpu: 0.0.40
codegen_flags: <defaults>
</compile_context>

<pallas_src>
from typing import NamedTuple

import jax
import jax.numpy as jnp
from jax.experimental import pallas as pl
from jax.experimental.pallas import tpu as pltpu


def _round_up(n, m):
    return ((n + m - 1) // m) * m


class CriticParams(NamedTuple):
    """Weights pre-transposed / split / padded / bf16-cast for the kernel."""
    w1t: jax.Array    # [statesDim, H1P] bf16  (fc1^T, cols padded to 256)
    b1p: jax.Array    # [1, H1P] f32
    w2t_h: jax.Array  # [H1P, H2P] bf16  (fc2^T rows for the h1 part)
    w2t_a: jax.Array  # [actionDim, H2P] bf16 (fc2^T rows for the action part)
    b2p: jax.Array    # [1, H2P] f32
    w3p: jax.Array    # [outputdim, H2P] f32
    b3r: jax.Array    # [1, outputdim] f32


def prepare_critic_params(params, states_dim, action_dim, hidden1, outputdim):
    """One-time prep so the per-call forward does zero weight shuffling."""
    w1, b1, w2, b2, w3, b3 = params
    hidden2 = w2.shape[0]
    h1p = _round_up(hidden1, 128)   # 228 -> 256
    h2p = _round_up(hidden2, 128)   # 128 -> 128

    # fc1^T with lane-padded output columns (padded cols produce relu(0)=0).
    w1t = jnp.zeros((states_dim, h1p), jnp.float32).at[:, :hidden1].set(w1.T)
    b1p = jnp.zeros((1, h1p), jnp.float32).at[0, :hidden1].set(b1)

    # fc2^T split by input rows: [0, hidden1) act on h1, the last action_dim
    # rows act on `a`.  Padded rows/cols are zero so padded lanes add 0.
    w2t = w2.T  # [hidden1 + action_dim, hidden2]
    w2t_h = jnp.zeros((h1p, h2p), jnp.float32).at[:hidden1, :hidden2].set(
        w2t[:hidden1])
    w2t_a = jnp.zeros((action_dim, h2p), jnp.float32).at[:, :hidden2].set(
        w2t[hidden1:])
    b2p = jnp.zeros((1, h2p), jnp.float32).at[0, :hidden2].set(b2)

    w3p = jnp.zeros((outputdim, h2p), jnp.float32).at[:, :hidden2].set(w3)
    b3r = b3.reshape(1, outputdim)

    return CriticParams(
        w1t=w1t.astype(jnp.bfloat16),
        b1p=b1p,
        w2t_h=w2t_h.astype(jnp.bfloat16),
        w2t_a=w2t_a.astype(jnp.bfloat16),
        b2p=b2p,
        w3p=w3p,
        b3r=b3r,
    )


def _critic_kernel(x_ref, a_ref, w1_ref, b1_ref, w2h_ref, w2a_ref, b2_ref,
                   w3_ref, b3_ref, out_ref):
    # fc1 + ReLU: bf16 MXU operands, f32 accumulation / bias / ReLU.
    h1 = jnp.dot(x_ref[...].astype(jnp.bfloat16), w1_ref[...],
                 preferred_element_type=jnp.float32) + b1_ref[...]
    h1 = jnp.maximum(h1, 0.0)
    # fc2 over the (implicit) concat [h1, a]: one aligned K=256 matmul for
    # the h1 part + one tiny K=actionDim matmul for the action part.
    h2 = (jnp.dot(h1.astype(jnp.bfloat16), w2h_ref[...],
                  preferred_element_type=jnp.float32)
          + jnp.dot(a_ref[...].astype(jnp.bfloat16), w2a_ref[...],
                    preferred_element_type=jnp.float32)
          + b2_ref[...])
    h2 = jnp.maximum(h2, 0.0)
    # fc3.
    if w3_ref.shape[0] == 1:
        # outputdim == 1: VPU multiply + lane reduce (skip a 1-col MXU op).
        out = jnp.sum(h2 * w3_ref[...], axis=1, keepdims=True)
    else:
        out = jax.lax.dot_general(
            h2, w3_ref[...], (((1,), (1,)), ((), ())),
            preferred_element_type=jnp.float32)
    out_ref[...] = out + b3_ref[...]


def critic_forward(x, a, p: CriticParams, *, block_b=None):
    """x: [B, statesDim], a: [B, actionDim] -> [B, outputdim] (float32)."""
    B = x.shape[0]
    outputdim = p.w3p.shape[0]

    inputs = (x, a, p.w1t, p.b1p, p.w2t_h, p.w2t_a, p.b2p, p.w3p, p.b3r)
    out_shape = jax.ShapeDtypeStruct((B, outputdim), jnp.float32)

    if block_b is None or B <= block_b:
        # Small batch: grid-free, whole arrays resident in VMEM.
        vmem = pl.BlockSpec(memory_space=pltpu.MemorySpace.VMEM)
        return pl.pallas_call(
            _critic_kernel,
            out_shape=out_shape,
            in_specs=[vmem] * len(inputs),
            out_specs=vmem,
        )(*inputs)

    # Large batch: tile the batch, mark it "parallel" (megacore / v7x TCs),
    # keep weights VMEM-resident via constant index maps.
    batch_map = lambda i: (i, 0)
    const_map = lambda i: (0, 0)
    in_specs = [pl.BlockSpec((block_b, x.shape[1]), batch_map),
                pl.BlockSpec((block_b, a.shape[1]), batch_map)]
    in_specs += [pl.BlockSpec(t.shape, const_map) for t in inputs[2:]]
    return pl.pallas_call(
        _critic_kernel,
        out_shape=out_shape,
        grid=(pl.cdiv(B, block_b),),
        in_specs=in_specs,
        out_specs=pl.BlockSpec((block_b, outputdim), batch_map),
        compiler_params=pltpu.CompilerParams(
            dimension_semantics=("parallel",)),
    )(*inputs)


# ----------------------- init / reference (plain JAX) -----------------------

def xavier_uniform(key, out_f, in_f):
    bound = jnp.sqrt(6.0 / (in_f + out_f))
    return jax.random.uniform(key, (out_f, in_f), jnp.float32, -bound, bound)


def linear_bias(key, out_f, in_f):
    # PyTorch default Linear bias init: U(-1/sqrt(fan_in), 1/sqrt(fan_in))
    bound = 1.0 / jnp.sqrt(jnp.float32(in_f))
    return jax.random.uniform(key, (out_f,), jnp.float32, -bound, bound)


def init_critic_params(key, states_dim, outputdim, hidden1, action_dim):
    hidden2 = hidden1 - 100
    ks = jax.random.split(key, 6)
    w1 = xavier_uniform(ks[0], hidden1, states_dim)
    b1 = linear_bias(ks[1], hidden1, states_dim)
    w2 = xavier_uniform(ks[2], hidden2, hidden1 + action_dim)
    b2 = linear_bias(ks[3], hidden2, hidden1 + action_dim)
    w3 = xavier_uniform(ks[4], outputdim, hidden2)
    b3 = linear_bias(ks[5], outputdim, hidden2)
    return (w1, b1, w2, b2, w3, b3)


def critic_reference(x, a, params):
    w1, b1, w2, b2, w3, b3 = params
    h1 = jnp.maximum(x @ w1.T + b1, 0.0)
    h2 = jnp.maximum(jnp.concatenate([h1, a], axis=1) @ w2.T + b2, 0.0)
    return h2 @ w3.T + b3


if __name__ == "__main__":
    # LunarLanderContinuous-like dims.
    B, statesDim, actionDim = 8, 8, 2
    hidden1, outputdim = 228, 1   # hidden2 = 128

    key = jax.random.PRNGKey(0)
    kx, ka, kp, kx2, ka2 = jax.random.split(key, 5)
    x = jax.random.normal(kx, (B, statesDim), jnp.float32)
    a = jax.random.normal(ka, (B, actionDim), jnp.float32)
    params = init_critic_params(kp, statesDim, outputdim, hidden1, actionDim)

    # One-time weight prep (hoisted out of the forward path).
    prepped = prepare_critic_params(params, statesDim, actionDim,
                                    hidden1, outputdim)

    # Small-batch, grid-free path.
    fwd = jax.jit(lambda xx, aa: critic_forward(xx, aa, prepped))
    out = jax.block_until_ready(fwd(x, a))
    ref = critic_reference(x, a, params)
    assert out.shape == (B, outputdim)
    # bf16 matmul operands -> loosened tolerance vs the f32 reference.
    assert jnp.allclose(out, ref, atol=5e-2, rtol=5e-2), \
        float(jnp.max(jnp.abs(out - ref)))

    # Larger-batch, batch-tiled "parallel" path (exercises the grid variant).
    B2 = 256
    x2 = jax.random.normal(kx2, (B2, statesDim), jnp.float32)
    a2 = jax.random.normal(ka2, (B2, actionDim), jnp.float32)
    fwd_tiled = jax.jit(
        lambda xx, aa: critic_forward(xx, aa, prepped, block_b=128))
    out2 = jax.block_until_ready(fwd_tiled(x2, a2))
    ref2 = critic_reference(x2, a2, params)
    assert jnp.allclose(out2, ref2, atol=5e-2, rtol=5e-2), \
        float(jnp.max(jnp.abs(out2 - ref2)))

    print("KERNEL_OK")
</pallas_src>

<mosaic_0001>
module attributes {stable_mosaic.version = 11 : i64} {
  func.func @_critic_kernel(%arg0: memref<8x8xf32, #tpu.memory_space<vmem>>, %arg1: memref<8x2xf32, #tpu.memory_space<vmem>>, %arg2: memref<8x256xbf16, #tpu.memory_space<vmem>>, %arg3: memref<1x256xf32, #tpu.memory_space<vmem>>, %arg4: memref<256x128xbf16, #tpu.memory_space<vmem>>, %arg5: memref<2x128xbf16, #tpu.memory_space<vmem>>, %arg6: memref<1x128xf32, #tpu.memory_space<vmem>>, %arg7: memref<1x128xf32, #tpu.memory_space<vmem>>, %arg8: memref<1x1xf32, #tpu.memory_space<vmem>>, %arg9: memref<8x1xf32, #tpu.memory_space<vmem>>) attributes {dimension_semantics = [], scalar_prefetch = 0 : i64, scratch_operands = 0 : i64, tpu.core_type = #tpu.core_type<tc>} {
    %c0 = arith.constant 0 : index
    %c0_0 = arith.constant 0 : index
    %0 = vector.load %arg0[%c0, %c0_0] : memref<8x8xf32, #tpu.memory_space<vmem>>, vector<8x8xf32>
    %1 = arith.truncf %0 : vector<8x8xf32> to vector<8x8xbf16>
    %c0_1 = arith.constant 0 : index
    %c0_2 = arith.constant 0 : index
    %2 = vector.load %arg2[%c0_1, %c0_2] : memref<8x256xbf16, #tpu.memory_space<vmem>>, vector<8x256xbf16>
    %cst = arith.constant dense<0.000000e+00> : vector<8x256xf32>
    %3 = tpu.matmul %1, %2, %cst {dimension_numbers = #tpu.dot_dimension_numbers<[1], [0], [0], [1], [0, 0, 1, 1], [], []>} : vector<8x8xbf16>, vector<8x256xbf16>, vector<8x256xf32> -> vector<8x256xf32>
    %c0_3 = arith.constant 0 : index
    %c0_4 = arith.constant 0 : index
    %4 = vector.load %arg3[%c0_3, %c0_4] : memref<1x256xf32, #tpu.memory_space<vmem>>, vector<1x256xf32>
    %5 = vector.broadcast %4 : vector<1x256xf32> to vector<8x256xf32>
    %6 = arith.addf %3, %5 : vector<8x256xf32>
    %cst_5 = arith.constant 0.000000e+00 : f32
    %7 = vector.broadcast %cst_5 : f32 to vector<8x256xf32>
    %8 = arith.maximumf %6, %7 : vector<8x256xf32>
    %9 = arith.truncf %8 : vector<8x256xf32> to vector<8x256xbf16>
    %c0_6 = arith.constant 0 : index
    %c0_7 = arith.constant 0 : index
    %10 = vector.load %arg4[%c0_6, %c0_7] : memref<256x128xbf16, #tpu.memory_space<vmem>>, vector<256x128xbf16>
    %cst_8 = arith.constant dense<0.000000e+00> : vector<8x128xf32>
    %11 = tpu.matmul %9, %10, %cst_8 {dimension_numbers = #tpu.dot_dimension_numbers<[1], [0], [0], [1], [0, 0, 1, 1], [], []>} : vector<8x256xbf16>, vector<256x128xbf16>, vector<8x128xf32> -> vector<8x128xf32>
    %c0_9 = arith.constant 0 : index
    %c0_10 = arith.constant 0 : index
    %12 = vector.load %arg1[%c0_9, %c0_10] : memref<8x2xf32, #tpu.memory_space<vmem>>, vector<8x2xf32>
    %13 = arith.truncf %12 : vector<8x2xf32> to vector<8x2xbf16>
    %c0_11 = arith.constant 0 : index
    %c0_12 = arith.constant 0 : index
    %14 = vector.load %arg5[%c0_11, %c0_12] : memref<2x128xbf16, #tpu.memory_space<vmem>>, vector<2x128xbf16>
    %cst_13 = arith.constant dense<0.000000e+00> : vector<8x128xf32>
    %15 = tpu.matmul %13, %14, %cst_13 {dimension_numbers = #tpu.dot_dimension_numbers<[1], [0], [0], [1], [0, 0, 1, 1], [], []>} : vector<8x2xbf16>, vector<2x128xbf16>, vector<8x128xf32> -> vector<8x128xf32>
    %16 = arith.addf %11, %15 : vector<8x128xf32>
    %c0_14 = arith.constant 0 : index
    %c0_15 = arith.constant 0 : index
    %17 = vector.load %arg6[%c0_14, %c0_15] : memref<1x128xf32, #tpu.memory_space<vmem>>, vector<1x128xf32>
    %18 = vector.broadcast %17 : vector<1x128xf32> to vector<8x128xf32>
    %19 = arith.addf %16, %18 : vector<8x128xf32>
    %cst_16 = arith.constant 0.000000e+00 : f32
    %20 = vector.broadcast %cst_16 : f32 to vector<8x128xf32>
    %21 = arith.maximumf %19, %20 : vector<8x128xf32>
    %c0_17 = arith.constant 0 : index
    %c0_18 = arith.constant 0 : index
    %22 = vector.load %arg7[%c0_17, %c0_18] : memref<1x128xf32, #tpu.memory_space<vmem>>, vector<1x128xf32>
    %23 = vector.broadcast %22 : vector<1x128xf32> to vector<8x128xf32>
    %24 = arith.mulf %21, %23 : vector<8x128xf32>
    %cst_19 = arith.constant dense<0.000000e+00> : vector<8xf32>
    %25 = vector.multi_reduction <add>, %24, %cst_19 [1] : vector<8x128xf32> to vector<8xf32>
    %26 = vector.shape_cast %25 : vector<8xf32> to vector<8x1xf32>
    %c0_20 = arith.constant 0 : index
    %c0_21 = arith.constant 0 : index
    %27 = vector.load %arg8[%c0_20, %c0_21] : memref<1x1xf32, #tpu.memory_space<vmem>>, vector<1x1xf32>
    %28 = vector.broadcast %27 : vector<1x1xf32> to vector<8x1xf32>
    %29 = arith.addf %26, %28 : vector<8x1xf32>
    %c0_22 = arith.constant 0 : index
    %c0_23 = arith.constant 0 : index
    %30 = vector.load %arg9[%c0_22, %c0_23] : memref<8x1xf32, #tpu.memory_space<vmem>>, vector<8x1xf32>
    tpu.vector_store %arg9[%c0_22, %c0_23], %29 {strides = array<i32>} : memref<8x1xf32, #tpu.memory_space<vmem>>, vector<8x1xf32>,
    return
  }
}

</mosaic_0001>

<llo_original>
// kernel: _lambda_.1
$region0: #{_lambda_.1}
  #allocation0 [shape = 'u32[]', space=smem, size = 0x4, offset = 0x4, fixed_abs, tag = 'smem constant byte address 0x4 - core index']
  #allocation1 [shape = 'u32[72,128]{1,0:T(1,128)}', space=vmem, size = 0x9000, scoped, tag = 'internal scratch']
  #allocation2 [shape = 'f32[1,1]{1,0:T(1,128)S(1)}', space=vmem, size = 0x200, scoped, tag = 'scoped memory for _lambda_.1']
  %s0 = inlined_call_operand.vmem [shape: f32[8,8], index: 0, kind: input, shape index: {}]
  %s1 = inlined_call_operand.vmem [shape: f32[8,2], index: 1, kind: input, shape index: {}]
  %s2 = inlined_call_operand.hbm [shape: bf16[8,256], index: 2, kind: input, shape index: {}]
  %s3 = inlined_call_operand.vmem [shape: f32[1,256], index: 3, kind: input, shape index: {}]
  %s4 = inlined_call_operand.hbm [shape: bf16[256,128], index: 4, kind: input, shape index: {}]
  %s5 = inlined_call_operand.vmem [shape: bf16[2,128], index: 5, kind: input, shape index: {}]
  %s6 = inlined_call_operand.vmem [shape: f32[1,128], index: 6, kind: input, shape index: {}]
  %s7 = inlined_call_operand.vmem [shape: f32[1,128], index: 7, kind: input, shape index: {}]
  %s8 = inlined_call_operand.<no memory space> [shape: f32[1,1], index: 8, kind: input, shape index: {}]
  %s9 = inlined_call_operand.vmem [shape: f32[8,1], index: 9, kind: output, shape index: {}]
  %s10 = sld [smem:[#allocation0]]
  $region54: #{_lambda_.1} parent=0
    _
  %s12 = ssub.s32 1, %s10
  %s13 = scalar_select 0, %s12, %s10
  %v14 = vstv %s8
  %15 = vst [vmem:[#allocation2] sm:$0x1] %v14
  $region1: #{_lambda_.1} parent=0
    #allocation3 [shape = 'u8[4096]{0}', space=vmem, size = 0x1000, scoped, tag = 'input window, operand 2, single buffered']
    #allocation4 [shape = 's32[1]{0}', space=sflag, size = 0x4, scoped, tag = 'scoped memory for _lambda_.1']
    #allocation5 [shape = 'u8[65536]{0}', space=vmem, size = 0x10000, scoped, tag = 'input window, operand 4, single buffered']
    #allocation6 [shape = 's32[1]{0}', space=sflag, size = 0x4, scoped, tag = 'scoped memory for _lambda_.1']
    %16 = vsyncpa [#allocation4], 0
    %17 = vsyncpa [#allocation6], 0
    // Predicated region
    $region2: #{_lambda_.1} parent=1 // pred_check
      _
    $region3: #{_lambda_.1} parent=1 // pred_check_branch
      %19 = sbr.rel (0) target = $region5
    $region4: #{_lambda_.1} parent=1 // pred_region
      _
    $region5: #{_lambda_.1} parent=1 // pred_fallthru
      _
    // Predicated region
    $region6: #{_lambda_.1} parent=1 // pred_check
      _
    $region7: #{_lambda_.1} parent=1 // pred_check_branch
      %21 = sbr.rel (0) target = $region9
    $region8: #{_lambda_.1} parent=1 // pred_region
      _
    $region9: #{_lambda_.1} parent=1 // pred_fallthru
      _
    // Predicated region
    $region10: #{_lambda_.1} parent=1 // pred_check
      _
    $region11: #{_lambda_.1} parent=1 // pred_check_branch
      %23 = sbr.rel (0) target = $region13
    $region12: #{_lambda_.1} parent=1 // pred_region
      %25 = vsyncadd [#allocation4], 0
      %s27 = sshll.u32 %s2, 4
      %s28 = int_to_ptr.hbm [resolvable:$true] %s27
      %s29 = sshll.u32 [#allocation3], 4
      %s30 = int_to_ptr.vmem [resolvable:$true] %s29
      %32 = dma.hbm_to_vmem [thread:$0]  %s28, 128, %s30, [#allocation4]
    $region13: #{_lambda_.1} parent=1 // pred_fallthru
      _
    // Predicated region
    $region14: #{_lambda_.1} parent=1 // pred_check
      _
    $region15: #{_lambda_.1} parent=1 // pred_check_branch
      %34 = sbr.rel (0) target = $region17
    $region16: #{_lambda_.1} parent=1 // pred_region
      _
    $region17: #{_lambda_.1} parent=1 // pred_fallthru
      _
    // Predicated region
    $region18: #{_lambda_.1} parent=1 // pred_check
      _
    $region19: #{_lambda_.1} parent=1 // pred_check_branch
      %36 = sbr.rel (0) target = $region21
    $region20: #{_lambda_.1} parent=1 // pred_region
      %38 = vsyncadd [#allocation6], 0
      %s39 = sshll.u32 %s4, 4
      %s40 = int_to_ptr.hbm [resolvable:$true] %s39
      %s41 = sshll.u32 [#allocation5], 4
      %s42 = int_to_ptr.vmem [resolvable:$true] %s41
      %47 = dma.hbm_to_vmem [thread:$0]  %s40, 2048, %s42, [#allocation6], 64, 64, 4
    $region21: #{_lambda_.1} parent=1 // pred_fallthru
      _
    // Predicated region
    $region22: #{_lambda_.1} parent=1 // pred_check
      _
    $region23: #{_lambda_.1} parent=1 // pred_check_branch
      %49 = sbr.rel (0) target = $region25
    $region24: #{_lambda_.1} parent=1 // pred_region
      _
    $region25: #{_lambda_.1} parent=1 // pred_fallthru
      _
    // Predicated region
    $region26: #{_lambda_.1} parent=1 // pred_check
      _
    $region27: #{_lambda_.1} parent=1 // pred_check_branch
      %51 = sbr.rel (0) target = $region29
    $region28: #{_lambda_.1} parent=1 // pred_region
      _
    $region29: #{_lambda_.1} parent=1 // pred_fallthru
      _
    // Predicated region
    $region30: #{_lambda_.1} parent=1 // pred_check
      _
    $region31: #{_lambda_.1} parent=1 // pred_check_branch
      %53 = sbr.rel (0) target = $region33
    $region32: #{_lambda_.1} parent=1 // pred_region
      _
    $region33: #{_lambda_.1} parent=1 // pred_fallthru
      _
    // Predicated region
    $region34: #{_lambda_.1} parent=1 // pred_check
      _
    $region35: #{_lambda_.1} parent=1 // pred_check_branch
      %55 = sbr.rel (0) target = $region37
    $region36: #{_lambda_.1} parent=1 // pred_region
      _
    $region37: #{_lambda_.1} parent=1 // pred_fallthru
      _
    // Predicated region
    $region38: #{_lambda_.1} parent=1 // pred_check
      _
    $region39: #{_lambda_.1} parent=1 // pred_check_branch
      %57 = sbr.rel (0) target = $region41
    $region40: #{_lambda_.1} parent=1 // pred_region
      %59 = dma.done [#allocation4], 128
    $region41: #{_lambda_.1} parent=1 // pred_fallthru
      _
    // Predicated region
    $region42: #{_lambda_.1} parent=1 // pred_check
      _
    $region43: #{_lambda_.1} parent=1 // pred_check_branch
      %61 = sbr.rel (0) target = $region45
    $region44: #{_lambda_.1} parent=1 // pred_region
      %63 = dma.done [#allocation6], 2048
    $region45: #{_lambda_.1} parent=1 // pred_fallthru
      _
    %v65 = vld [vmem:[%s0] sm:$0xff]
    %v66 = vpack.c.bf16 %v65, %v65
    %v67 = vld [vmem:[#allocation3] sm:$0xff]
    %v68 = vld [vmem:[%s3] sm:$0x3]
    %v70 = vperm.slane %v68, 0
    %v71 = vperm.slane %v68, 1
    %v75 = vunpack.c.l.b16 %v67
    %v76 = vunpack.c.h.b16 %v67
    %v77 = vpack.c.b16 %v75, %v75
    %v78 = vpack.c.b16 %v76, %v76
    %vm79 = vcmask 64512
    %v81 = vsel %vm79, %v66, 0
    %vm83 = vcmask 1043456
    %v85 = vsel %vm83, %v77, 0
    %v88 = vsel %vm83, %v78, 0
    %90 = vmatpush.bf16.msra.mxu0 0
    %91 = vmatpush.bf16.msra.mxu0 0
    %92 = vmatpush.bf16.msra.mxu0 0
    %93 = vmatpush.bf16.msra.mxu0 0
    %94 = vmatpush.bf16.msra.mxu0 0
    %95 = vmatpush.bf16.msra.mxu0 0
    %96 = vmatpush.bf16.msra.mxu0 0
    %97 = vmatpush.bf16.msra.mxu0 %v85
    %98 = vmatmul.bf16.gmra.mxu0 %v81
    %v99 = vpop.f32.mrf.mxu0
    %v100 = vadd.f32 %v70, %v99
    %v101 = vpop.f32.mrf.mxu0
    %102 = vdwg.mxu0
    %103 = vmatpush.bf16.msra.mxu0 0
    %104 = vmatpush.bf16.msra.mxu0 0
    %105 = vmatpush.bf16.msra.mxu0 0
    %106 = vmatpush.bf16.msra.mxu0 0
    %107 = vmatpush.bf16.msra.mxu0 0
    %108 = vmatpush.bf16.msra.mxu0 0
    %109 = vmatpush.bf16.msra.mxu0 0
    %110 = vmatpush.bf16.msra.mxu0 %v88
    %111 = vmatmul.bf16.gmra.mxu0 %v81
    %v112 = vpop.f32.mrf.mxu0
    %v113 = vadd.f32 %v71, %v112
    %v114 = vpop.f32.mrf.mxu0
    %115 = vdwg.mxu0
    %v116 = vmax.f32 %v100, 0.0
    %v117 = vmax.f32 %v113, 0.0
    %v118 = vpack.c.bf16 %v116, %v116
    %v119 = vpack.c.bf16 %v117, %v117
    %v120 = vld [vmem:[#allocation5] sm:$0xf]
    %v121 = vld [vmem:[#allocation5 + $0x4] sm:$0xf]
    %v122 = vld [vmem:[#allocation5 + $0x8] sm:$0xf]
    %v123 = vld [vmem:[#allocation5 + $0xc] sm:$0xf]
    %v124 = vld [vmem:[#allocation5 + $0x10] sm:$0xf]
    %v125 = vld [vmem:[#allocation5 + $0x14] sm:$0xf]
    %v126 = vld [vmem:[#allocation5 + $0x18] sm:$0xf]
    %v127 = vld [vmem:[#allocation5 + $0x1c] sm:$0xf]
    %v128 = vld [vmem:[#allocation5 + $0x20] sm:$0xf]
    %v129 = vld [vmem:[#allocation5 + $0x24] sm:$0xf]
    %v130 = vld [vmem:[#allocation5 + $0x28] sm:$0xf]
    %v131 = vld [vmem:[#allocation5 + $0x2c] sm:$0xf]
    %v132 = vld [vmem:[#allocation5 + $0x30] sm:$0xf]
    %v133 = vld [vmem:[#allocation5 + $0x34] sm:$0xf]
    %v134 = vld [vmem:[#allocation5 + $0x38] sm:$0xf]
    %v135 = vld [vmem:[#allocation5 + $0x3c] sm:$0xf]
    %v136 = vld [vmem:[#allocation5 + $0x40] sm:$0xf]
    %v137 = vld [vmem:[#allocation5 + $0x44] sm:$0xf]
    %v138 = vld [vmem:[#allocation5 + $0x48] sm:$0xf]
    %v139 = vld [vmem:[#allocation5 + $0x4c] sm:$0xf]
    %v140 = vld [vmem:[#allocation5 + $0x50] sm:$0xf]
    %v141 = vld [vmem:[#allocation5 + $0x54] sm:$0xf]
    %v142 = vld [vmem:[#allocation5 + $0x58] sm:$0xf]
    %v143 = vld [vmem:[#allocation5 + $0x5c] sm:$0xf]
    %v144 = vld [vmem:[#allocation5 + $0x60] sm:$0xf]
    %v145 = vld [vmem:[#allocation5 + $0x64] sm:$0xf]
    %v146 = vld [vmem:[#allocation5 + $0x68] sm:$0xf]
    %v147 = vld [vmem:[#allocation5 + $0x6c] sm:$0xf]
    %v148 = vld [vmem:[#allocation5 + $0x70] sm:$0xf]
    %v149 = vld [vmem:[#allocation5 + $0x74] sm:$0xf]
    %v150 = vld [vmem:[#allocation5 + $0x78] sm:$0xf]
    %v151 = vld [vmem:[#allocation5 + $0x7c] sm:$0xf]
    %v152 = vld [vmem:[%s1] sm:$0xff]
    %v153 = vpack.c.bf16 %v152, %v152
    %v154 = vld [vmem:[%s5] sm:$0x1]
    %vm155 = vcmask 15360
    %v157 = vsel %vm155, %v153, 0
    %vm159 = vcmask 1040384
    %v161 = vsel %vm159, %v154, 0
    %163 = vmatpush.bf16.msra.mxu0 0
    %164 = vmatpush.bf16.msra.mxu0 0
    %165 = vmatpush.bf16.msra.mxu0 0
    %166 = vmatpush.bf16.msra.mxu0 0
    %167 = vmatpush.bf16.msra.mxu0 0
    %168 = vmatpush.bf16.msra.mxu0 0
    %169 = vmatpush.bf16.msra.mxu0 0
    %170 = vmatpush.bf16.msra.mxu0 %v161
    %171 = vmatmul.bf16.gmra.mxu0 %v157
    %v172 = vpop.f32.mrf.mxu0
    %v173 = vadd.f32 0.0, %v172
    %v174 = vpop.f32.mrf.mxu0
    %175 = vdwg.mxu0
    %v208 = vunpack.c.l.b16 %v120
    %v209 = vunpack.c.l.b16 %v121
    %v210 = vunpack.c.l.b16 %v122
    %v211 = vunpack.c.l.b16 %v123
    %v212 = vunpack.c.l.b16 %v124
    %v213 = vunpack.c.l.b16 %v125
    %v214 = vunpack.c.l.b16 %v126
    %v215 = vunpack.c.l.b16 %v127
    %v216 = vunpack.c.l.b16 %v128
    %v217 = vunpack.c.l.b16 %v129
    %v218 = vunpack.c.l.b16 %v130
    %v219 = vunpack.c.l.b16 %v131
    %v220 = vunpack.c.l.b16 %v132
    %v221 = vunpack.c.l.b16 %v133
    %v222 = vunpack.c.l.b16 %v134
    %v223 = vunpack.c.l.b16 %v135
    %v224 = vunpack.c.l.b16 %v136
    %v225 = vunpack.c.l.b16 %v137
    %v226 = vunpack.c.l.b16 %v138
    %v227 = vunpack.c.l.b16 %v139
    %v228 = vunpack.c.l.b16 %v140
    %v229 = vunpack.c.l.b16 %v141
    %v230 = vunpack.c.l.b16 %v142
    %v231 = vunpack.c.l.b16 %v143
    %v232 = vunpack.c.l.b16 %v144
    %v233 = vunpack.c.l.b16 %v145
    %v234 = vunpack.c.l.b16 %v146
    %v235 = vunpack.c.l.b16 %v147
    %v236 = vunpack.c.l.b16 %v148
    %v237 = vunpack.c.l.b16 %v149
    %v238 = vunpack.c.l.b16 %v150
    %v239 = vunpack.c.l.b16 %v151
    %v240 = vpack.c.b16 %v209, %v208
    %v241 = vpack.c.b16 %v211, %v210
    %v242 = vpack.c.b16 %v213, %v212
    %v243 = vpack.c.b16 %v215, %v214
    %v244 = vpack.c.b16 %v217, %v216
    %v245 = vpack.c.b16 %v219, %v218
    %v246 = vpack.c.b16 %v221, %v220
    %v247 = vpack.c.b16 %v223, %v222
    %v248 = vpack.c.b16 %v225, %v224
    %v249 = vpack.c.b16 %v227, %v226
    %v250 = vpack.c.b16 %v229, %v228
    %v251 = vpack.c.b16 %v231, %v230
    %v252 = vpack.c.b16 %v233, %v232
    %v253 = vpack.c.b16 %v235, %v234
    %v254 = vpack.c.b16 %v237, %v236
    %v255 = vpack.c.b16 %v239, %v238
    %272 = vmatpush.bf16.msra.mxu0 %v247
    %273 = vmatpush.bf16.msra.mxu0 %v246
    %274 = vmatpush.bf16.msra.mxu0 %v245
    %275 = vmatpush.bf16.msra.mxu0 %v244
    %276 = vmatpush.bf16.msra.mxu0 %v243
    %277 = vmatpush.bf16.msra.mxu0 %v242
    %278 = vmatpush.bf16.msra.mxu0 %v241
    %279 = vmatpush.bf16.msra.mxu0 %v240
    %280 = vmatmul.bf16.gmra.mxu0 %v118
    %v281 = vpop.f32.mrf.mxu0
    %v282 = vadd.f32 %v173, %v281
    %v283 = vpop.f32.mrf.mxu0
    %284 = vdwg.mxu0
    %285 = vmatpush.bf16.msra.mxu0 %v255
    %286 = vmatpush.bf16.msra.mxu0 %v254
    %287 = vmatpush.bf16.msra.mxu0 %v253
    %288 = vmatpush.bf16.msra.mxu0 %v252
    %289 = vmatpush.bf16.msra.mxu0 %v251
    %290 = vmatpush.bf16.msra.mxu0 %v250
    %291 = vmatpush.bf16.msra.mxu0 %v249
    %292 = vmatpush.bf16.msra.mxu0 %v248
    %293 = vmatmul.bf16.gmra.mxu0 %v119
    %v294 = vpop.f32.mrf.mxu0
    %v295 = vadd.f32 %v282, %v294
    %v296 = vpop.f32.mrf.mxu0
    %297 = vdwg.mxu0
    %v298 = vld [vmem:[%s6] sm:$0x1]
    %v300 = vperm.slane %v298, 0
    %v302 = vadd.f32 %v295, %v300
    %v303 = vmax.f32 %v302, 0.0
    %v304 = vld [vmem:[%s7] sm:$0x1]
    %v306 = vperm.slane %v304, 0
    %v308 = vmul.f32 %v303, %v306
    %309 = vadd.xlane.f32.xlu0 %v308
    %v310 = vpop.xlane.xlu0 %309
    %v311 = vld [vmem:[#allocation2] sm:$0x1]
    %v313 = vperm.slane %v311, 0
    %v315 = vadd.f32 %v310, %v313
    %vm316 = vcmask 7168
    %317 = vst.msk [vmem:[%s9] sm:$0xff] %vm316, %v315
    // Predicated region
    $region46: #{_lambda_.1} parent=1 // pred_check
      _
    $region47: #{_lambda_.1} parent=1 // pred_check_branch
      %319 = sbr.rel (0) target = $region49
    $region48: #{_lambda_.1} parent=1 // pred_region
      _
    $region49: #{_lambda_.1} parent=1 // pred_fallthru
      _
    // Predicated region
    $region50: #{_lambda_.1} parent=1 // pred_check
      _
    $region51: #{_lambda_.1} parent=1 // pred_check_branch
      %321 = sbr.rel (0) target = $region53
    $region52: #{_lambda_.1} parent=1 // pred_region
      _
    $region53: #{_lambda_.1} parent=1 // pred_fallthru
      _
    %322 = vsyncpa [#allocation4], 1
    %323 = vsyncpa [#allocation6], 1

</llo_original>
